<compile_context>
chip_gen: v5e
topology: v5e:2x2
jax: 0.10.0
libtpu: 0.0.40
codegen_flags: <defaults>
</compile_context>

<pallas_src>
import functools

import jax
import jax.numpy as jnp
from jax.experimental import pallas as pl
from jax.experimental.pallas import tpu as pltpu


LEAKY_SLOPE = 0.01       # torch.nn.LeakyReLU default negative_slope
_MAX_BATCH_TILE = 2048   # lane-padded (tb,128) f32 blocks, double-buffered, fit 32 MiB easily
_HEAD_LANES = 128        # lane-dense output slab width


def _round_up(x: int, m: int) -> int:
    return ((x + m - 1) // m) * m


def _plan_batch(batch: int):
    """Pick (batch_tile, padded_batch).

    - batch is padded in the wrapper so tiles never collapse to tiny sizes.
    - for batches > 16 rows we guarantee >= 2 grid steps (v7x megacore sharding).
    """
    b8 = _round_up(batch, 8)          # sublane granularity
    if b8 <= 16:
        return b8, b8                 # too small to split; single full block
    tb = min(_MAX_BATCH_TILE, _round_up(b8 // 2, 8))
    padded = _round_up(b8, tb)
    return tb, padded


def _make_encoder_kernel(n_hidden_layers: int, latent_dim: int):
    """Fused encoder kernel: hidden stack + fused, lane-padded [mean | log_var] head."""

    def kernel(*refs):
        # refs layout:
        #   [x,
        #    w_h0, b_h0, ..., w_h{L-1}, b_h{L-1},
        #    w_head, b_head,            # fused + 128-lane-padded [mean | log_var] head
        #    out]                       # (tb, 128): [mean | std | pad]
        x_ref = refs[0]
        param_refs = refs[1: 1 + 2 * n_hidden_layers + 2]
        out_ref = refs[-1]

        h = x_ref[...]
        if h.dtype != jnp.float32:
            h = h.astype(jnp.float32)

        # Hidden stack: Linear -> LeakyReLU
        for l in range(n_hidden_layers):
            w = param_refs[2 * l][...]
            b = param_refs[2 * l + 1][...]
            h = jnp.dot(h, w, preferred_element_type=jnp.float32) + b
            h = jnp.where(h > 0, h, LEAKY_SLOPE * h)

        # Fused head: one matmul produces [mean | log_var | zero-pad] along 128 lanes.
        w_head = param_refs[-2][...]
        b_head = param_refs[-1][...]
        z = jnp.dot(h, w_head, preferred_element_type=jnp.float32) + b_head

        # lanes [0, latent)         -> mean (identity)
        # lanes [latent, 2*latent)  -> std = exp(0.5 * log_var)
        # lanes [2*latent, 128)     -> pad (exp(0) = 1, discarded outside the kernel)
        lane = jax.lax.broadcasted_iota(jnp.int32, z.shape, 1)
        out = jnp.where(lane >= latent_dim, jnp.exp(0.5 * z), z)
        out_ref[...] = out.astype(out_ref.dtype)

    return kernel


def init_encoder_params(key, hidden_sizes, input_size, latent_dim):
    """Deterministic PyTorch-Linear-style uniform init, weights stored (in, out)."""
    params = []
    architecture = [input_size] + list(hidden_sizes)

    def make_linear(k, in_dim, out_dim):
        kw, kb = jax.random.split(k)
        bound = 1.0 / jnp.sqrt(jnp.float32(in_dim))
        w = jax.random.uniform(kw, (in_dim, out_dim), jnp.float32, -bound, bound)
        b = jax.random.uniform(kb, (1, out_dim), jnp.float32, -bound, bound)
        return w, b

    keys = jax.random.split(key, len(hidden_sizes) + 2)
    for i, (in_dim, out_dim) in enumerate(zip(architecture[:-1], architecture[1:])):
        params.extend(make_linear(keys[i], in_dim, out_dim))
    # mean head
    params.extend(make_linear(keys[len(hidden_sizes)], architecture[-1], latent_dim))
    # log_var head
    params.extend(make_linear(keys[len(hidden_sizes) + 1], architecture[-1], latent_dim))
    return params


def prepare_encoder_params(params, n_hidden_layers, latent_dim):
    """One-time parameter prep (outside the per-call path):

    Fuses the mean/log_var head weights along the output dim and zero-pads them to
    128 output lanes so the kernel's output slab is lane-dense.
    """
    hidden_params = [jnp.asarray(p, jnp.float32) for p in params[: 2 * n_hidden_layers]]
    wm, bm, wv, bv = params[2 * n_hidden_layers: 2 * n_hidden_layers + 4]
    w_head = jnp.concatenate([wm, wv], axis=1)   # (hidden_last, 2*latent)
    b_head = jnp.concatenate([bm, bv], axis=1)   # (1, 2*latent)

    out_lanes = max(_HEAD_LANES, _round_up(2 * latent_dim, 128))
    pad = out_lanes - 2 * latent_dim
    if pad:
        w_head = jnp.pad(w_head, ((0, 0), (0, pad)))
        b_head = jnp.pad(b_head, ((0, 0), (0, pad)))

    return hidden_params + [w_head.astype(jnp.float32), b_head.astype(jnp.float32)]


@functools.partial(jax.jit, static_argnames=("n_hidden_layers", "latent_dim"))
def encoder_forward(x, prepared_params, *, n_hidden_layers, latent_dim):
    batch, input_size = x.shape
    out_lanes = prepared_params[-1].shape[1]     # 128-lane-padded head width

    tb, padded_batch = _plan_batch(batch)
    if padded_batch != batch:
        # Pad the batch in the wrapper instead of degrading to tiny grid tiles.
        x = jnp.pad(x, ((0, padded_batch - batch), (0, 0)))
    grid = (padded_batch // tb,)

    # x / out are tiled over batch; weights/biases get constant index_maps (full-array
    # blocks) so they are DMA'd once and stay resident across grid steps.
    x_spec = pl.BlockSpec((tb, input_size), lambda i: (i, 0))
    param_specs = [pl.BlockSpec(p.shape, lambda i: (0, 0)) for p in prepared_params]
    out_spec = pl.BlockSpec((tb, out_lanes), lambda i: (i, 0))

    kernel = _make_encoder_kernel(n_hidden_layers, latent_dim)

    combined = pl.pallas_call(
        kernel,
        out_shape=jax.ShapeDtypeStruct((padded_batch, out_lanes), jnp.float32),
        grid=grid,
        in_specs=[x_spec] + param_specs,
        out_specs=out_spec,
        compiler_params=pltpu.CompilerParams(
            dimension_semantics=("parallel",),   # shard batch tiles across TCs on v7x
            vmem_limit_bytes=32 * 1024 * 1024,   # headroom for 2048-row lane-padded tiles
        ),
    )(x, *prepared_params)

    mean = combined[:batch, :latent_dim]
    std = combined[:batch, latent_dim: 2 * latent_dim]
    return mean, std


def encoder_forward_ref(x, params, n_hidden_layers):
    """Pure-JAX reference for correctness checking (matches the PyTorch forward)."""
    h = x
    for l in range(n_hidden_layers):
        w, b = params[2 * l], params[2 * l + 1]
        h = h @ w + b
        h = jnp.where(h > 0, h, LEAKY_SLOPE * h)
    wm, bm = params[2 * n_hidden_layers], params[2 * n_hidden_layers + 1]
    wv, bv = params[2 * n_hidden_layers + 2], params[2 * n_hidden_layers + 3]
    mean = h @ wm + bm
    std = jnp.sqrt(jnp.exp(h @ wv + bv))
    return mean, std


if __name__ == "__main__":
    # Small shapes consistent with the module: Encoder(hidden_sizes=[32, 32],
    # input_size=16, latent_dim=8).
    hidden_sizes = [32, 32]
    input_size = 16
    latent_dim = 8
    n_hidden = len(hidden_sizes)

    key = jax.random.PRNGKey(0)
    k_x, k_x2, k_p = jax.random.split(key, 3)
    params = init_encoder_params(k_p, hidden_sizes, input_size, latent_dim)
    prepared = prepare_encoder_params(params, n_hidden, latent_dim)

    # Case 1: tiny batch (single full-block grid step).
    batch = 8
    x = jax.random.normal(k_x, (batch, input_size), jnp.float32)
    mean, std = encoder_forward(x, prepared, n_hidden_layers=n_hidden, latent_dim=latent_dim)
    jax.block_until_ready((mean, std))
    mean_ref, std_ref = encoder_forward_ref(x, params, n_hidden)
    assert mean.shape == (batch, latent_dim) and std.shape == (batch, latent_dim)
    assert jnp.allclose(mean, mean_ref, atol=1e-5, rtol=1e-5)
    assert jnp.allclose(std, std_ref, atol=1e-5, rtol=1e-5)

    # Case 2: non-tile-aligned batch -> exercises wrapper padding + multi-step grid.
    batch2 = 200
    x2 = jax.random.normal(k_x2, (batch2, input_size), jnp.float32)
    mean2, std2 = encoder_forward(x2, prepared, n_hidden_layers=n_hidden, latent_dim=latent_dim)
    jax.block_until_ready((mean2, std2))
    mean2_ref, std2_ref = encoder_forward_ref(x2, params, n_hidden)
    assert mean2.shape == (batch2, latent_dim) and std2.shape == (batch2, latent_dim)
    assert jnp.allclose(mean2, mean2_ref, atol=1e-5, rtol=1e-5)
    assert jnp.allclose(std2, std2_ref, atol=1e-5, rtol=1e-5)

    print("KERNEL_OK")
</pallas_src>

<mosaic_0001>
module attributes {stable_mosaic.version = 11 : i64} {
  func.func @kernel(%arg0: i32, %arg1: memref<8x16xf32, #tpu.memory_space<vmem>>, %arg2: memref<16x32xf32, #tpu.memory_space<vmem>>, %arg3: memref<1x32xf32, #tpu.memory_space<vmem>>, %arg4: memref<32x32xf32, #tpu.memory_space<vmem>>, %arg5: memref<1x32xf32, #tpu.memory_space<vmem>>, %arg6: memref<32x128xf32, #tpu.memory_space<vmem>>, %arg7: memref<1x128xf32, #tpu.memory_space<vmem>>, %arg8: memref<8x128xf32, #tpu.memory_space<vmem>>) attributes {dimension_semantics = [#tpu.dimension_semantics<parallel>], iteration_bounds = array<i64: 1>, scalar_prefetch = 0 : i64, scratch_operands = 0 : i64, tpu.core_type = #tpu.core_type<tc>, window_params = [{transform_indices = @transform_0, window_bounds = array<i64: 8, 16>}, {pipeline_mode = #tpu.pipeline_mode<synchronous>, transform_indices = @transform_1, window_bounds = array<i64: 16, 32>}, {pipeline_mode = #tpu.pipeline_mode<synchronous>, transform_indices = @transform_2, window_bounds = array<i64: 1, 32>}, {pipeline_mode = #tpu.pipeline_mode<synchronous>, transform_indices = @transform_3, window_bounds = array<i64: 32, 32>}, {pipeline_mode = #tpu.pipeline_mode<synchronous>, transform_indices = @transform_4, window_bounds = array<i64: 1, 32>}, {pipeline_mode = #tpu.pipeline_mode<synchronous>, transform_indices = @transform_5, window_bounds = array<i64: 32, 128>}, {pipeline_mode = #tpu.pipeline_mode<synchronous>, transform_indices = @transform_6, window_bounds = array<i64: 1, 128>}, {transform_indices = @transform_7, window_bounds = array<i64: 8, 128>}]} {
    %c0 = arith.constant 0 : index
    %c0_0 = arith.constant 0 : index
    %0 = vector.load %arg1[%c0, %c0_0] : memref<8x16xf32, #tpu.memory_space<vmem>>, vector<8x16xf32>
    %c0_1 = arith.constant 0 : index
    %c0_2 = arith.constant 0 : index
    %1 = vector.load %arg2[%c0_1, %c0_2] : memref<16x32xf32, #tpu.memory_space<vmem>>, vector<16x32xf32>
    %c0_3 = arith.constant 0 : index
    %c0_4 = arith.constant 0 : index
    %2 = vector.load %arg3[%c0_3, %c0_4] : memref<1x32xf32, #tpu.memory_space<vmem>>, vector<1x32xf32>
    %cst = arith.constant dense<0.000000e+00> : vector<8x32xf32>
    %3 = tpu.matmul %0, %1, %cst {dimension_numbers = #tpu.dot_dimension_numbers<[1], [0], [0], [1], [0, 0, 1, 1], [], []>} : vector<8x16xf32>, vector<16x32xf32>, vector<8x32xf32> -> vector<8x32xf32>
    %4 = vector.broadcast %2 : vector<1x32xf32> to vector<8x32xf32>
    %5 = arith.addf %3, %4 : vector<8x32xf32>
    %cst_5 = arith.constant 0.000000e+00 : f32
    %6 = vector.broadcast %cst_5 : f32 to vector<8x32xf32>
    %7 = arith.cmpf ogt, %5, %6 : vector<8x32xf32>
    %cst_6 = arith.constant 0.00999999977 : f32
    %8 = vector.broadcast %cst_6 : f32 to vector<8x32xf32>
    %9 = arith.mulf %8, %5 : vector<8x32xf32>
    %10 = arith.select %7, %5, %9 : vector<8x32xi1>, vector<8x32xf32>
    %c0_7 = arith.constant 0 : index
    %c0_8 = arith.constant 0 : index
    %11 = vector.load %arg4[%c0_7, %c0_8] : memref<32x32xf32, #tpu.memory_space<vmem>>, vector<32x32xf32>
    %c0_9 = arith.constant 0 : index
    %c0_10 = arith.constant 0 : index
    %12 = vector.load %arg5[%c0_9, %c0_10] : memref<1x32xf32, #tpu.memory_space<vmem>>, vector<1x32xf32>
    %cst_11 = arith.constant dense<0.000000e+00> : vector<8x32xf32>
    %13 = tpu.matmul %10, %11, %cst_11 {dimension_numbers = #tpu.dot_dimension_numbers<[1], [0], [0], [1], [0, 0, 1, 1], [], []>} : vector<8x32xf32>, vector<32x32xf32>, vector<8x32xf32> -> vector<8x32xf32>
    %14 = vector.broadcast %12 : vector<1x32xf32> to vector<8x32xf32>
    %15 = arith.addf %13, %14 : vector<8x32xf32>
    %cst_12 = arith.constant 0.000000e+00 : f32
    %16 = vector.broadcast %cst_12 : f32 to vector<8x32xf32>
    %17 = arith.cmpf ogt, %15, %16 : vector<8x32xf32>
    %cst_13 = arith.constant 0.00999999977 : f32
    %18 = vector.broadcast %cst_13 : f32 to vector<8x32xf32>
    %19 = arith.mulf %18, %15 : vector<8x32xf32>
    %20 = arith.select %17, %15, %19 : vector<8x32xi1>, vector<8x32xf32>
    %c0_14 = arith.constant 0 : index
    %c0_15 = arith.constant 0 : index
    %21 = vector.load %arg6[%c0_14, %c0_15] : memref<32x128xf32, #tpu.memory_space<vmem>>, vector<32x128xf32>
    %c0_16 = arith.constant 0 : index
    %c0_17 = arith.constant 0 : index
    %22 = vector.load %arg7[%c0_16, %c0_17] : memref<1x128xf32, #tpu.memory_space<vmem>>, vector<1x128xf32>
    %cst_18 = arith.constant dense<0.000000e+00> : vector<8x128xf32>
    %23 = tpu.matmul %20, %21, %cst_18 {dimension_numbers = #tpu.dot_dimension_numbers<[1], [0], [0], [1], [0, 0, 1, 1], [], []>} : vector<8x32xf32>, vector<32x128xf32>, vector<8x128xf32> -> vector<8x128xf32>
    %24 = vector.broadcast %22 : vector<1x128xf32> to vector<8x128xf32>
    %25 = arith.addf %23, %24 : vector<8x128xf32>
    %26 = tpu.iota {dimensions = array<i32: 1>} : vector<8x128xi32>
    %c8_i32 = arith.constant 8 : i32
    %27 = vector.broadcast %c8_i32 : i32 to vector<8x128xi32>
    %28 = arith.cmpi sge, %26, %27 : vector<8x128xi32>
    %cst_19 = arith.constant 5.000000e-01 : f32
    %29 = vector.broadcast %cst_19 : f32 to vector<8x128xf32>
    %30 = arith.mulf %29, %25 : vector<8x128xf32>
    %31 = math.exp %30 : vector<8x128xf32>
    %32 = arith.select %28, %31, %25 : vector<8x128xi1>, vector<8x128xf32>
    %c0_20 = arith.constant 0 : index
    %c0_21 = arith.constant 0 : index
    %33 = vector.load %arg8[%c0_20, %c0_21] : memref<8x128xf32, #tpu.memory_space<vmem>>, vector<8x128xf32>
    tpu.vector_store %arg8[%c0_20, %c0_21], %32 {strides = array<i32>} : memref<8x128xf32, #tpu.memory_space<vmem>>, vector<8x128xf32>,
    return
  }
  func.func @transform_0(%arg0: i32) -> (i32, i32) {
    %c0_i32 = arith.constant 0 : i32
    %c0_i32_0 = arith.constant 0 : i32
    return %arg0, %c0_i32 : i32, i32
  }
  func.func @transform_1(%arg0: i32) -> (i32, i32) {
    %c0_i32 = arith.constant 0 : i32
    %c0_i32_0 = arith.constant 0 : i32
    %c0_i32_1 = arith.constant 0 : i32
    return %c0_i32, %c0_i32_0 : i32, i32
  }
  func.func @transform_2(%arg0: i32) -> (i32, i32) {
    %c0_i32 = arith.constant 0 : i32
    %c0_i32_0 = arith.constant 0 : i32
    %c0_i32_1 = arith.constant 0 : i32
    return %c0_i32, %c0_i32_0 : i32, i32
  }
  func.func @transform_3(%arg0: i32) -> (i32, i32) {
    %c0_i32 = arith.constant 0 : i32
    %c0_i32_0 = arith.constant 0 : i32
    %c0_i32_1 = arith.constant 0 : i32
    return %c0_i32, %c0_i32_0 : i32, i32
  }
  func.func @transform_4(%arg0: i32) -> (i32, i32) {
    %c0_i32 = arith.constant 0 : i32
    %c0_i32_0 = arith.constant 0 : i32
    %c0_i32_1 = arith.constant 0 : i32
    return %c0_i32, %c0_i32_0 : i32, i32
  }
  func.func @transform_5(%arg0: i32) -> (i32, i32) {
    %c0_i32 = arith.constant 0 : i32
    %c0_i32_0 = arith.constant 0 : i32
    %c0_i32_1 = arith.constant 0 : i32
    return %c0_i32, %c0_i32_0 : i32, i32
  }
  func.func @transform_6(%arg0: i32) -> (i32, i32) {
    %c0_i32 = arith.constant 0 : i32
    %c0_i32_0 = arith.constant 0 : i32
    %c0_i32_1 = arith.constant 0 : i32
    return %c0_i32, %c0_i32_0 : i32, i32
  }
  func.func @transform_7(%arg0: i32) -> (i32, i32) {
    %c0_i32 = arith.constant 0 : i32
    %c0_i32_0 = arith.constant 0 : i32
    return %arg0, %c0_i32 : i32, i32
  }
}

</mosaic_0001>

<llo_original>
// kernel: encoder_forward.1
$region0: #{encoder_forward.1}
  #allocation0 [shape = 'u32[]', space=smem, size = 0x4, offset = 0x4, fixed_abs, tag = 'smem constant byte address 0x4 - core index']
  #allocation1 [shape = 'u32[72,128]{1,0:T(1,128)}', space=vmem, size = 0x9000, scoped, tag = 'internal scratch']
  %s0 = inlined_call_operand.hbm [shape: f32[8,16], index: 0, kind: input, shape index: {}]
  %s1 = inlined_call_operand.hbm [shape: f32[16,32], index: 1, kind: input, shape index: {}]
  %s2 = inlined_call_operand.vmem [shape: f32[1,32], index: 2, kind: input, shape index: {}]
  %s3 = inlined_call_operand.hbm [shape: f32[32,32], index: 3, kind: input, shape index: {}]
  %s4 = inlined_call_operand.vmem [shape: f32[1,32], index: 4, kind: input, shape index: {}]
  %s5 = inlined_call_operand.hbm [shape: f32[32,128], index: 5, kind: input, shape index: {}]
  %s6 = inlined_call_operand.vmem [shape: f32[1,128], index: 6, kind: input, shape index: {}]
  %s7 = inlined_call_operand.vmem [shape: f32[8,128], index: 7, kind: output, shape index: {}]
  %s8 = sld [smem:[#allocation0]]
  $region54: #{encoder_forward.1} parent=0
    _
  %s10 = ssub.s32 1, %s8
  %s11 = scalar_select 0, %s10, %s8
  $region1: #{encoder_forward.1} parent=0
    #allocation2 [shape = 'u8[4096]{0}', space=vmem, size = 0x1000, scoped, tag = 'input window, operand 0, single buffered']
    #allocation3 [shape = 's32[1]{0}', space=sflag, size = 0x4, scoped, tag = 'scoped memory for encoder_forward.1']
    #allocation4 [shape = 'u8[8192]{0}', space=vmem, size = 0x2000, scoped, tag = 'input window, operand 1, single buffered']
    #allocation5 [shape = 's32[1]{0}', space=sflag, size = 0x4, scoped, tag = 'scoped memory for encoder_forward.1']
    #allocation6 [shape = 'u8[16384]{0}', space=vmem, size = 0x4000, scoped, tag = 'input window, operand 3, single buffered']
    #allocation7 [shape = 'u8[16384]{0}', space=vmem, size = 0x4000, scoped, tag = 'input window, operand 5, single buffered']
    #allocation8 [shape = 's32[1]{0}', space=sflag, size = 0x4, scoped, tag = 'scoped memory for encoder_forward.1']
    %12 = vsyncpa [#allocation3], 0
    %13 = vsyncpa [#allocation5], 0
    %14 = vsyncpa [#allocation8], 0
    // Predicated region
    $region2: #{encoder_forward.1} parent=1 // pred_check
      _
    $region3: #{encoder_forward.1} parent=1 // pred_check_branch
      %16 = sbr.rel (0) target = $region5
    $region4: #{encoder_forward.1} parent=1 // pred_region
      %18 = vsyncadd [#allocation3], 0
      %s20 = sshll.u32 %s0, 4
      %s21 = int_to_ptr.hbm [resolvable:$true] %s20
      %s22 = sshll.u32 [#allocation2], 4
      %s23 = int_to_ptr.vmem [resolvable:$true] %s22
      %25 = dma.hbm_to_vmem [thread:$0]  %s21, 128, %s23, [#allocation3]
    $region5: #{encoder_forward.1} parent=1 // pred_fallthru
      _
    // Predicated region
    $region6: #{encoder_forward.1} parent=1 // pred_check
      _
    $region7: #{encoder_forward.1} parent=1 // pred_check_branch
      %27 = sbr.rel (0) target = $region9
    $region8: #{encoder_forward.1} parent=1 // pred_region
      %29 = vsyncadd [#allocation5], 0
      %s30 = sshll.u32 %s1, 4
      %s31 = int_to_ptr.hbm [resolvable:$true] %s30
      %s32 = sshll.u32 [#allocation4], 4
      %s33 = int_to_ptr.vmem [resolvable:$true] %s32
      %38 = dma.hbm_to_vmem [thread:$0]  %s31, 256, %s33, [#allocation5], 128, 128, 8
    $region9: #{encoder_forward.1} parent=1 // pred_fallthru
      _
    // Predicated region
    $region10: #{encoder_forward.1} parent=1 // pred_check
      _
    $region11: #{encoder_forward.1} parent=1 // pred_check_branch
      %40 = sbr.rel (0) target = $region13
    $region12: #{encoder_forward.1} parent=1 // pred_region
      _
    $region13: #{encoder_forward.1} parent=1 // pred_fallthru
      _
    // Predicated region
    $region14: #{encoder_forward.1} parent=1 // pred_check
      _
    $region15: #{encoder_forward.1} parent=1 // pred_check_branch
      %42 = sbr.rel (0) target = $region17
    $region16: #{encoder_forward.1} parent=1 // pred_region
      %44 = vsyncadd [#allocation5], 0
      %s45 = sshll.u32 %s3, 4
      %s46 = int_to_ptr.hbm [resolvable:$true] %s45
      %s47 = sshll.u32 [#allocation6], 4
      %s48 = int_to_ptr.vmem [resolvable:$true] %s47
      %53 = dma.hbm_to_vmem [thread:$0]  %s46, 512, %s48, [#allocation5], 128, 128, 8
    $region17: #{encoder_forward.1} parent=1 // pred_fallthru
      _
    // Predicated region
    $region18: #{encoder_forward.1} parent=1 // pred_check
      _
    $region19: #{encoder_forward.1} parent=1 // pred_check_branch
      %55 = sbr.rel (0) target = $region21
    $region20: #{encoder_forward.1} parent=1 // pred_region
      _
    $region21: #{encoder_forward.1} parent=1 // pred_fallthru
      _
    // Predicated region
    $region22: #{encoder_forward.1} parent=1 // pred_check
      _
    $region23: #{encoder_forward.1} parent=1 // pred_check_branch
      %57 = sbr.rel (0) target = $region25
    $region24: #{encoder_forward.1} parent=1 // pred_region
      %59 = vsyncadd [#allocation8], 0
      %s60 = sshll.u32 %s5, 4
      %s61 = int_to_ptr.hbm [resolvable:$true] %s60
      %s62 = sshll.u32 [#allocation7], 4
      %s63 = int_to_ptr.vmem [resolvable:$true] %s62
      %68 = dma.hbm_to_vmem [thread:$0]  %s61, 512, %s63, [#allocation8], 128, 128, 8
    $region25: #{encoder_forward.1} parent=1 // pred_fallthru
      _
    // Predicated region
    $region26: #{encoder_forward.1} parent=1 // pred_check
      _
    $region27: #{encoder_forward.1} parent=1 // pred_check_branch
      %70 = sbr.rel (0) target = $region29
    $region28: #{encoder_forward.1} parent=1 // pred_region
      _
    $region29: #{encoder_forward.1} parent=1 // pred_fallthru
      _
    // Predicated region
    $region30: #{encoder_forward.1} parent=1 // pred_check
      _
    $region31: #{encoder_forward.1} parent=1 // pred_check_branch
      %72 = sbr.rel (0) target = $region33
    $region32: #{encoder_forward.1} parent=1 // pred_region
      %74 = dma.done [#allocation3], 128
    $region33: #{encoder_forward.1} parent=1 // pred_fallthru
      _
    // Predicated region
    $region34: #{encoder_forward.1} parent=1 // pred_check
      _
    $region35: #{encoder_forward.1} parent=1 // pred_check_branch
      %76 = sbr.rel (0) target = $region37
    $region36: #{encoder_forward.1} parent=1 // pred_region
      %78 = dma.done [#allocation5], 256
    $region37: #{encoder_forward.1} parent=1 // pred_fallthru
      _
    // Predicated region
    $region38: #{encoder_forward.1} parent=1 // pred_check
      _
    $region39: #{encoder_forward.1} parent=1 // pred_check_branch
      %80 = sbr.rel (0) target = $region41
    $region40: #{encoder_forward.1} parent=1 // pred_region
      %82 = dma.done [#allocation5], 512
    $region41: #{encoder_forward.1} parent=1 // pred_fallthru
      _
    // Predicated region
    $region42: #{encoder_forward.1} parent=1 // pred_check
      _
    $region43: #{encoder_forward.1} parent=1 // pred_check_branch
      %84 = sbr.rel (0) target = $region45
    $region44: #{encoder_forward.1} parent=1 // pred_region
      %86 = dma.done [#allocation8], 512
    $region45: #{encoder_forward.1} parent=1 // pred_fallthru
      _
    %v87 = vld [vmem:[#allocation2] sm:$0xff]
    %v88 = vld [vmem:[#allocation4] sm:$0xff]
    %v89 = vld [vmem:[#allocation4 + $0x8] sm:$0xff]
    %v90 = vld [vmem:[%s2] sm:$0x1]
    %v92 = vperm.slane %v90, 0
    %vm94 = vcmask 130048
    %v96 = vsel %vm94, %v87, 0
    %98 = vmatpush.msra.mxu0 0.0
    %99 = vmatpush.msra.mxu0 0.0
    %100 = vmatpush.msra.mxu0 0.0
    %101 = vmatpush.msra.mxu0 0.0
    %102 = vmatpush.msra.mxu0 0.0
    %103 = vmatpush.msra.mxu0 0.0
    %104 = vmatpush.msra.mxu0 0.0
    %105 = vmatpush.msra.mxu0 0.0
    %106 = vmatpush.msra.mxu0 0.0
    %107 = vmatpush.msra.mxu0 0.0
    %108 = vmatpush.msra.mxu0 0.0
    %109 = vmatpush.msra.mxu0 0.0
    %110 = vmatpush.msra.mxu0 0.0
    %111 = vmatpush.msra.mxu0 0.0
    %112 = vmatpush.msra.mxu0 %v89
    %113 = vmatpush.msra.mxu0 %v88
    %114 = vmatmul.f32.gmra.mxu0 %v96
    %v115 = vpop.f32.mrf.mxu0
    %v116 = vadd.f32 %v92, %v115
    %117 = vdwg.mxu0
    %vm118 = vcmp.gt.f32.partialorder %v116, 0.0
    %v119 = vmul.f32 %v116, 0.01
    %v120 = vsel %vm118, %v116, %v119
    %v121 = vld [vmem:[#allocation6] sm:$0xff]
    %v122 = vld [vmem:[#allocation6 + $0x8] sm:$0xff]
    %v123 = vld [vmem:[#allocation6 + $0x10] sm:$0xff]
    %v124 = vld [vmem:[#allocation6 + $0x18] sm:$0xff]
    %v125 = vld [vmem:[%s4] sm:$0x1]
    %v127 = vperm.slane %v125, 0
    %vm129 = vcmask 261120
    %v131 = vsel %vm129, %v120, 0
    %133 = vmatpush.msra.mxu0 0.0
    %134 = vmatpush.msra.mxu0 0.0
    %135 = vmatpush.msra.mxu0 0.0
    %136 = vmatpush.msra.mxu0 0.0
    %137 = vmatpush.msra.mxu0 0.0
    %138 = vmatpush.msra.mxu0 0.0
    %139 = vmatpush.msra.mxu0 0.0
    %140 = vmatpush.msra.mxu0 0.0
    %141 = vmatpush.msra.mxu0 0.0
    %142 = vmatpush.msra.mxu0 0.0
    %143 = vmatpush.msra.mxu0 0.0
    %144 = vmatpush.msra.mxu0 0.0
    %145 = vmatpush.msra.mxu0 %v124
    %146 = vmatpush.msra.mxu0 %v123
    %147 = vmatpush.msra.mxu0 %v122
    %148 = vmatpush.msra.mxu0 %v121
    %149 = vmatmul.f32.gmra.mxu0 %v131
    %v150 = vpop.f32.mrf.mxu0
    %v151 = vadd.f32 %v127, %v150
    %152 = vdwg.mxu0
    %vm153 = vcmp.gt.f32.partialorder %v151, 0.0
    %v154 = vmul.f32 %v151, 0.01
    %v155 = vsel %vm153, %v151, %v154
    %v156 = vld [vmem:[#allocation7] sm:$0xff]
    %v157 = vld [vmem:[#allocation7 + $0x8] sm:$0xff]
    %v158 = vld [vmem:[#allocation7 + $0x10] sm:$0xff]
    %v159 = vld [vmem:[#allocation7 + $0x18] sm:$0xff]
    %v160 = vld [vmem:[%s6] sm:$0x1]
    %v162 = vperm.slane %v160, 0
    %v165 = vsel %vm129, %v155, 0
    %167 = vmatpush.msra.mxu0 0.0
    %168 = vmatpush.msra.mxu0 0.0
    %169 = vmatpush.msra.mxu0 0.0
    %170 = vmatpush.msra.mxu0 0.0
    %171 = vmatpush.msra.mxu0 0.0
    %172 = vmatpush.msra.mxu0 0.0
    %173 = vmatpush.msra.mxu0 0.0
    %174 = vmatpush.msra.mxu0 0.0
    %175 = vmatpush.msra.mxu0 0.0
    %176 = vmatpush.msra.mxu0 0.0
    %177 = vmatpush.msra.mxu0 0.0
    %178 = vmatpush.msra.mxu0 0.0
    %179 = vmatpush.msra.mxu0 %v159
    %180 = vmatpush.msra.mxu0 %v158
    %181 = vmatpush.msra.mxu0 %v157
    %182 = vmatpush.msra.mxu0 %v156
    %183 = vmatmul.f32.gmra.mxu0 %v165
    %v184 = vpop.f32.mrf.mxu0
    %v185 = vadd.f32 %v162, %v184
    %186 = vdwg.mxu0
    %v187 = vlaneseq
    %v188 = vand.u32 %v187, 127
    %vm189 = vcmp.ge.s32.totalorder %v188, 8
    %v190 = vmul.f32 %v185, 0.5
    %v191 = vmul.f32 %v190, 1.442695
    %v192 = vpow.pop %v191
    %v193 = vsel %vm189, %v192, %v185
    %194 = vst [vmem:[%s7] sm:$0xff] %v193
    // Predicated region
    $region46: #{encoder_forward.1} parent=1 // pred_check
      _
    $region47: #{encoder_forward.1} parent=1 // pred_check_branch
      %196 = sbr.rel (0) target = $region49
    $region48: #{encoder_forward.1} parent=1 // pred_region
      _
    $region49: #{encoder_forward.1} parent=1 // pred_fallthru
      _
    // Predicated region
    $region50: #{encoder_forward.1} parent=1 // pred_check
      _
    $region51: #{encoder_forward.1} parent=1 // pred_check_branch
      %198 = sbr.rel (0) target = $region53
    $region52: #{encoder_forward.1} parent=1 // pred_region
      _
    $region53: #{encoder_forward.1} parent=1 // pred_fallthru
      _
    %199 = vsyncpa [#allocation3], 1
    %200 = vsyncpa [#allocation5], 1
    %201 = vsyncpa [#allocation8], 1

</llo_original>
